<compile_context>
chip_gen: v7x
topology: tpu7x:2x2x1
jax: 0.10.0
libtpu: 0.0.40
codegen_flags: <defaults>
</compile_context>

<pallas_src>
import functools

import jax
import jax.numpy as jnp
import numpy as np
from jax.experimental import pallas as pl
from jax.experimental.pallas import tpu as pltpu

HIDDEN = 256
LANE = 128


def _round_up(x, m):
    return ((x + m - 1) // m) * m


def _cdiv(a, b):
    return (a + b - 1) // b


def _mlp_kernel(pref_ref, w1_ref, b1_ref, w2_ref, b2_ref, w3_ref, b3_ref, out_ref):
    """One batch block: fc1 (VPU MACs) + relu, fc2 (MXU) + relu, fc3 (MXU) + sigmoid."""
    w_dtype = w2_ref.dtype          # f32, or bf16 for the fast-weight path
    x = pref_ref[...]               # (tm, n_obj) f32
    n_obj = x.shape[1]

    if n_obj <= 8:
        # Degenerate K: a (tm, n_obj) @ (n_obj, 256) matmul wastes the MXU and
        # forces a lane-sparse operand; n_obj unrolled VPU broadcast-MACs in
        # f32 are cheaper and keep x un-cast.
        w1 = w1_ref[...].astype(jnp.float32)        # (n_obj, HIDDEN)
        h1 = b1_ref[...]                            # (1, HIDDEN), broadcasts up
        for k in range(n_obj):                      # static unroll
            h1 = h1 + x[:, k:k + 1] * w1[k:k + 1, :]
    else:
        h1 = jnp.dot(x.astype(w_dtype), w1_ref[...],
                     preferred_element_type=jnp.float32) + b1_ref[...]
    h1 = jnp.maximum(h1, 0.0)                                            # relu (f32 VPU)

    h2 = jnp.dot(h1.astype(w_dtype), w2_ref[...],
                 preferred_element_type=jnp.float32) + b2_ref[...]
    h2 = jnp.maximum(h2, 0.0)                                            # relu (f32 VPU)

    z = jnp.dot(h2.astype(w_dtype), w3_ref[...],
                preferred_element_type=jnp.float32) + b3_ref[...]
    out_ref[...] = jax.nn.sigmoid(z)              # (tm, n_pad): lane-dense, unmasked store


@functools.partial(jax.jit, static_argnames=("block_rows", "min_blocks"))
def pareto_set_model_forward(pref, params, block_rows=512, min_blocks=2):
    """Device forward (float32 output). pref: (B, n_obj) float32 -> (B, n_var)."""
    w1, b1, w2, b2, w3, b3 = params
    B, n_obj = pref.shape
    n_var = w3.shape[1]

    # Lane-dense fc3 output: pad the output feature dim to a multiple of 128.
    # The extra zero columns just produce sigmoid(0)=0.5 and are sliced off.
    n_pad = max(LANE, _round_up(n_var, LANE))
    if n_pad != n_var:
        w3 = jnp.pad(w3, ((0, 0), (0, n_pad - n_var)))
        b3 = jnp.pad(b3, ((0, 0), (0, n_pad - n_var)))

    # Row tile: minimize grid steps and padding waste; force >= min_blocks
    # blocks (v7x megacore) when the batch is big enough to split usefully.
    nblk = _cdiv(B, block_rows)
    if B >= 16 * min_blocks:
        nblk = max(nblk, min_blocks)
    tm = _round_up(_cdiv(B, nblk), 8)
    Bp = tm * _cdiv(B, tm)
    if Bp != B:
        pref = jnp.pad(pref, ((0, Bp - B), (0, 0)))

    # Weights/biases: constant block index -> fetched once, VMEM-resident.
    resident = lambda shape: pl.BlockSpec(shape, lambda i: (0, 0))

    out_f32 = pl.pallas_call(
        _mlp_kernel,
        out_shape=jax.ShapeDtypeStruct((Bp, n_pad), jnp.float32),
        grid=(Bp // tm,),
        in_specs=[
            pl.BlockSpec((tm, n_obj), lambda i: (i, 0)),    # activation tiles pipeline
            resident((n_obj, HIDDEN)), resident((1, HIDDEN)),
            resident((HIDDEN, HIDDEN)), resident((1, HIDDEN)),
            resident((HIDDEN, n_pad)), resident((1, n_pad)),
        ],
        out_specs=pl.BlockSpec((tm, n_pad), lambda i: (i, 0)),
        compiler_params=pltpu.CompilerParams(
            dimension_semantics=("parallel",),   # v7x: 2 TCs split the batch blocks
            vmem_limit_bytes=8 << 20,            # working set << 8 MiB even at tm=1024
        ),
    )(pref, w1, b1, w2, b2, w3, b3)

    return out_f32[:B, :n_var]


def pareto_set_model_forward_f64(pref, params, block_rows=512):
    """Full module semantics including the final .to(torch.float64).

    The f64 cast is a host-side view: TPU has no hardware f64.
    """
    out = jax.block_until_ready(pareto_set_model_forward(pref, params, block_rows))
    return np.asarray(out, dtype=np.float64)


def to_bf16_weights(params):
    """Fast path on v5e/v6e/v7x: bf16 weight storage (MXU-native), f32 biases.

    Note: activations feeding the fc2/fc3 matmuls are also cast to bf16 on the
    MXU path, so accuracy reflects activation rounding, not weight-only quant.
    """
    w1, b1, w2, b2, w3, b3 = params
    return (w1.astype(jnp.bfloat16), b1,
            w2.astype(jnp.bfloat16), b2,
            w3.astype(jnp.bfloat16), b3)


def init_params(key, n_var, n_obj):
    """Deterministic init mimicking nn.Linear's U(-1/sqrt(fan_in), 1/sqrt(fan_in))."""
    def linear(k, fan_in, fan_out):
        kw, kb = jax.random.split(k)
        bound = 1.0 / np.sqrt(fan_in)
        w = jax.random.uniform(kw, (fan_in, fan_out), jnp.float32, -bound, bound)
        b = jax.random.uniform(kb, (1, fan_out), jnp.float32, -bound, bound)
        return w, b

    k1, k2, k3 = jax.random.split(key, 3)
    w1, b1 = linear(k1, n_obj, HIDDEN)
    w2, b2 = linear(k2, HIDDEN, HIDDEN)
    w3, b3 = linear(k3, HIDDEN, n_var)
    return (w1, b1, w2, b2, w3, b3)


if __name__ == "__main__":
    n_var, n_obj = 16, 3

    key = jax.random.PRNGKey(0)
    k_params, k_pref = jax.random.split(key)
    params = init_params(k_params, n_var, n_obj)
    w1, b1, w2, b2, w3, b3 = params

    def ref_forward(p):
        hp = jax.lax.Precision.HIGHEST
        h1 = jnp.maximum(jnp.dot(p, w1, precision=hp) + b1, 0.0)
        h2 = jnp.maximum(jnp.dot(h1, w2, precision=hp) + b2, 0.0)
        return jax.nn.sigmoid(jnp.dot(h2, w3, precision=hp) + b3)

    # Small batch that still exercises the 2-block grid and resident weights.
    B = 64
    raw = jax.random.uniform(k_pref, (B, n_obj), jnp.float32, 0.1, 1.0)
    pref = raw / jnp.sum(raw, axis=1, keepdims=True)

    out = pareto_set_model_forward_f64(pref, params)
    ref = np.asarray(ref_forward(pref), dtype=np.float64)
    np.testing.assert_allclose(out, ref, rtol=1e-3, atol=3e-3)
    assert out.shape == (B, n_var) and out.dtype == np.float64

    # Ragged small batch: exercises the pad/slice path (B not a multiple of 8).
    out_small = pareto_set_model_forward_f64(pref[:10], params)
    np.testing.assert_allclose(out_small, out[:10], rtol=1e-5, atol=1e-6)

    # bf16-weight fast path (all generations): f32 accumulation, loose tolerance.
    out_bf16 = jax.block_until_ready(
        pareto_set_model_forward(pref, to_bf16_weights(params)))
    assert np.max(np.abs(np.asarray(out_bf16, dtype=np.float64) - out)) < 5e-2

    print("KERNEL_OK")
</pallas_src>

<mosaic_0001>
module attributes {stable_mosaic.version = 11 : i64} {
  func.func @_mlp_kernel(%arg0: i32, %arg1: memref<32x3xf32, #tpu.memory_space<vmem>>, %arg2: memref<3x256xf32, #tpu.memory_space<vmem>>, %arg3: memref<1x256xf32, #tpu.memory_space<vmem>>, %arg4: memref<256x256xf32, #tpu.memory_space<vmem>>, %arg5: memref<1x256xf32, #tpu.memory_space<vmem>>, %arg6: memref<256x128xf32, #tpu.memory_space<vmem>>, %arg7: memref<1x128xf32, #tpu.memory_space<vmem>>, %arg8: memref<32x128xf32, #tpu.memory_space<vmem>>) attributes {dimension_semantics = [#tpu.dimension_semantics<parallel>], iteration_bounds = array<i64: 2>, scalar_prefetch = 0 : i64, scratch_operands = 0 : i64, tpu.core_type = #tpu.core_type<tc>, window_params = [{transform_indices = @transform_0, window_bounds = array<i64: 32, 3>}, {pipeline_mode = #tpu.pipeline_mode<synchronous>, transform_indices = @transform_1, window_bounds = array<i64: 3, 256>}, {pipeline_mode = #tpu.pipeline_mode<synchronous>, transform_indices = @transform_2, window_bounds = array<i64: 1, 256>}, {pipeline_mode = #tpu.pipeline_mode<synchronous>, transform_indices = @transform_3, window_bounds = array<i64: 256, 256>}, {pipeline_mode = #tpu.pipeline_mode<synchronous>, transform_indices = @transform_4, window_bounds = array<i64: 1, 256>}, {pipeline_mode = #tpu.pipeline_mode<synchronous>, transform_indices = @transform_5, window_bounds = array<i64: 256, 128>}, {pipeline_mode = #tpu.pipeline_mode<synchronous>, transform_indices = @transform_6, window_bounds = array<i64: 1, 128>}, {transform_indices = @transform_7, window_bounds = array<i64: 32, 128>}]} {
    %c0 = arith.constant 0 : index
    %c0_0 = arith.constant 0 : index
    %0 = vector.load %arg1[%c0, %c0_0] : memref<32x3xf32, #tpu.memory_space<vmem>>, vector<32x3xf32>
    %c0_1 = arith.constant 0 : index
    %c0_2 = arith.constant 0 : index
    %1 = vector.load %arg2[%c0_1, %c0_2] : memref<3x256xf32, #tpu.memory_space<vmem>>, vector<3x256xf32>
    %c0_3 = arith.constant 0 : index
    %c0_4 = arith.constant 0 : index
    %2 = vector.load %arg3[%c0_3, %c0_4] : memref<1x256xf32, #tpu.memory_space<vmem>>, vector<1x256xf32>
    %3 = vector.extract_strided_slice %0 {offsets = [0, 0], sizes = [32, 1], strides = [1, 1]} : vector<32x3xf32> to vector<32x1xf32>
    %4 = vector.extract_strided_slice %1 {offsets = [0, 0], sizes = [1, 256], strides = [1, 1]} : vector<3x256xf32> to vector<1x256xf32>
    %5 = vector.broadcast %3 : vector<32x1xf32> to vector<32x256xf32>
    %6 = vector.broadcast %4 : vector<1x256xf32> to vector<32x256xf32>
    %7 = arith.mulf %5, %6 : vector<32x256xf32>
    %8 = vector.broadcast %2 : vector<1x256xf32> to vector<32x256xf32>
    %9 = arith.addf %8, %7 : vector<32x256xf32>
    %10 = vector.extract_strided_slice %0 {offsets = [0, 1], sizes = [32, 1], strides = [1, 1]} : vector<32x3xf32> to vector<32x1xf32>
    %11 = vector.extract_strided_slice %1 {offsets = [1, 0], sizes = [1, 256], strides = [1, 1]} : vector<3x256xf32> to vector<1x256xf32>
    %12 = vector.broadcast %10 : vector<32x1xf32> to vector<32x256xf32>
    %13 = vector.broadcast %11 : vector<1x256xf32> to vector<32x256xf32>
    %14 = arith.mulf %12, %13 : vector<32x256xf32>
    %15 = arith.addf %9, %14 : vector<32x256xf32>
    %16 = vector.extract_strided_slice %0 {offsets = [0, 2], sizes = [32, 1], strides = [1, 1]} : vector<32x3xf32> to vector<32x1xf32>
    %17 = vector.extract_strided_slice %1 {offsets = [2, 0], sizes = [1, 256], strides = [1, 1]} : vector<3x256xf32> to vector<1x256xf32>
    %18 = vector.broadcast %16 : vector<32x1xf32> to vector<32x256xf32>
    %19 = vector.broadcast %17 : vector<1x256xf32> to vector<32x256xf32>
    %20 = arith.mulf %18, %19 : vector<32x256xf32>
    %21 = arith.addf %15, %20 : vector<32x256xf32>
    %cst = arith.constant 0.000000e+00 : f32
    %22 = vector.broadcast %cst : f32 to vector<32x256xf32>
    %23 = arith.maximumf %21, %22 : vector<32x256xf32>
    %c0_5 = arith.constant 0 : index
    %c0_6 = arith.constant 0 : index
    %24 = vector.load %arg4[%c0_5, %c0_6] : memref<256x256xf32, #tpu.memory_space<vmem>>, vector<256x256xf32>
    %cst_7 = arith.constant dense<0.000000e+00> : vector<32x256xf32>
    %25 = tpu.matmul %23, %24, %cst_7 {dimension_numbers = #tpu.dot_dimension_numbers<[1], [0], [0], [1], [0, 0, 1, 1], [], []>} : vector<32x256xf32>, vector<256x256xf32>, vector<32x256xf32> -> vector<32x256xf32>
    %c0_8 = arith.constant 0 : index
    %c0_9 = arith.constant 0 : index
    %26 = vector.load %arg5[%c0_8, %c0_9] : memref<1x256xf32, #tpu.memory_space<vmem>>, vector<1x256xf32>
    %27 = vector.broadcast %26 : vector<1x256xf32> to vector<32x256xf32>
    %28 = arith.addf %25, %27 : vector<32x256xf32>
    %cst_10 = arith.constant 0.000000e+00 : f32
    %29 = vector.broadcast %cst_10 : f32 to vector<32x256xf32>
    %30 = arith.maximumf %28, %29 : vector<32x256xf32>
    %c0_11 = arith.constant 0 : index
    %c0_12 = arith.constant 0 : index
    %31 = vector.load %arg6[%c0_11, %c0_12] : memref<256x128xf32, #tpu.memory_space<vmem>>, vector<256x128xf32>
    %cst_13 = arith.constant dense<0.000000e+00> : vector<32x128xf32>
    %32 = tpu.matmul %30, %31, %cst_13 {dimension_numbers = #tpu.dot_dimension_numbers<[1], [0], [0], [1], [0, 0, 1, 1], [], []>} : vector<32x256xf32>, vector<256x128xf32>, vector<32x128xf32> -> vector<32x128xf32>
    %c0_14 = arith.constant 0 : index
    %c0_15 = arith.constant 0 : index
    %33 = vector.load %arg7[%c0_14, %c0_15] : memref<1x128xf32, #tpu.memory_space<vmem>>, vector<1x128xf32>
    %34 = vector.broadcast %33 : vector<1x128xf32> to vector<32x128xf32>
    %35 = arith.addf %32, %34 : vector<32x128xf32>
    %36 = arith.negf %35 : vector<32x128xf32>
    %37 = math.exp %36 : vector<32x128xf32>
    %cst_16 = arith.constant 1.000000e+00 : f32
    %38 = vector.broadcast %cst_16 : f32 to vector<32x128xf32>
    %39 = arith.addf %38, %37 : vector<32x128xf32>
    %40 = arith.divf %38, %39 : vector<32x128xf32>
    %c0_17 = arith.constant 0 : index
    %c0_18 = arith.constant 0 : index
    %41 = vector.load %arg8[%c0_17, %c0_18] : memref<32x128xf32, #tpu.memory_space<vmem>>, vector<32x128xf32>
    tpu.vector_store %arg8[%c0_17, %c0_18], %40 {strides = array<i32>} : memref<32x128xf32, #tpu.memory_space<vmem>>, vector<32x128xf32>,
    return
  }
  func.func @transform_0(%arg0: i32) -> (i32, i32) {
    %c0_i32 = arith.constant 0 : i32
    %c0_i32_0 = arith.constant 0 : i32
    return %arg0, %c0_i32 : i32, i32
  }
  func.func @transform_1(%arg0: i32) -> (i32, i32) {
    %c0_i32 = arith.constant 0 : i32
    %c0_i32_0 = arith.constant 0 : i32
    %c0_i32_1 = arith.constant 0 : i32
    return %c0_i32, %c0_i32_0 : i32, i32
  }
  func.func @transform_2(%arg0: i32) -> (i32, i32) {
    %c0_i32 = arith.constant 0 : i32
    %c0_i32_0 = arith.constant 0 : i32
    %c0_i32_1 = arith.constant 0 : i32
    return %c0_i32, %c0_i32_0 : i32, i32
  }
  func.func @transform_3(%arg0: i32) -> (i32, i32) {
    %c0_i32 = arith.constant 0 : i32
    %c0_i32_0 = arith.constant 0 : i32
    %c0_i32_1 = arith.constant 0 : i32
    return %c0_i32, %c0_i32_0 : i32, i32
  }
  func.func @transform_4(%arg0: i32) -> (i32, i32) {
    %c0_i32 = arith.constant 0 : i32
    %c0_i32_0 = arith.constant 0 : i32
    %c0_i32_1 = arith.constant 0 : i32
    return %c0_i32, %c0_i32_0 : i32, i32
  }
  func.func @transform_5(%arg0: i32) -> (i32, i32) {
    %c0_i32 = arith.constant 0 : i32
    %c0_i32_0 = arith.constant 0 : i32
    %c0_i32_1 = arith.constant 0 : i32
    return %c0_i32, %c0_i32_0 : i32, i32
  }
  func.func @transform_6(%arg0: i32) -> (i32, i32) {
    %c0_i32 = arith.constant 0 : i32
    %c0_i32_0 = arith.constant 0 : i32
    %c0_i32_1 = arith.constant 0 : i32
    return %c0_i32, %c0_i32_0 : i32, i32
  }
  func.func @transform_7(%arg0: i32) -> (i32, i32) {
    %c0_i32 = arith.constant 0 : i32
    %c0_i32_0 = arith.constant 0 : i32
    return %arg0, %c0_i32 : i32, i32
  }
}

</mosaic_0001>

<llo_original>
// kernel: pareto_set_model_forward.1
$region0: #{pareto_set_model_forward.1}
  #allocation0 [shape = 'u32[]', space=smem, size = 0x4, offset = 0x4, fixed_abs, tag = 'smem constant byte address 0x4 - core index']
  #allocation1 [shape = 'u32[144,128]{1,0:T(1,128)}', space=vmem, size = 0x12000, scoped, tag = 'internal scratch']
  %s0 = inlined_call_operand.vmem [shape: f32[64,3], index: 0, kind: input, shape index: {}]
  %s1 = inlined_call_operand.vmem [shape: f32[3,256], index: 1, kind: input, shape index: {}]
  %s2 = inlined_call_operand.vmem [shape: f32[1,256], index: 2, kind: input, shape index: {}]
  %s3 = inlined_call_operand.vmem [shape: f32[256,256], index: 3, kind: input, shape index: {}]
  %s4 = inlined_call_operand.vmem [shape: f32[1,256], index: 4, kind: input, shape index: {}]
  %s5 = inlined_call_operand.vmem [shape: f32[256,128], index: 5, kind: input, shape index: {}]
  %s6 = inlined_call_operand.vmem [shape: f32[1,128], index: 6, kind: input, shape index: {}]
  %s7 = inlined_call_operand.vmem [shape: f32[64,128], index: 7, kind: output, shape index: {}]
  %s8 = sld [smem:[#allocation0]]
  $region61: #{pareto_set_model_forward.1} parent=0
    _
  %s10 = ssub.s32 1, %s8
  %s11 = scalar_select 0, %s10, %s8
  loop: start=0, step=1, limit=4
  $region2: #{pareto_set_model_forward.1} parent=0 // loop_pre_header
    _
  $region3: #{pareto_set_model_forward.1} parent=0 // loop_header
    %s13 = sphi 0, %s17
    %p14 = scmp.ge.s32.totalorder %s13, 4
    %s23 = sphi 0, %s25
    %s26 = sphi 0, %s23
    %s27 = sphi 0, %s26
    %s43 = sphi 0, %s27
    %s47 = sphi 0, %s47
    %s49 = sphi 0, %s47
    %s50 = sphi 0, %s49
    %s64 = sphi 0, %s50
    %s68 = sphi 0, %s68
    %s70 = sphi 0, %s68
    %s71 = sphi 0, %s70
    %s85 = sphi 0, %s71
    %s89 = sphi 0, %s89
    %s91 = sphi 0, %s89
    %s92 = sphi 0, %s91
    %s106 = sphi 0, %s92
    %s110 = sphi 0, %s110
    %s112 = sphi 0, %s110
    %s113 = sphi 0, %s112
    %s127 = sphi 0, %s113
    %s131 = sphi 0, %s131
    %s133 = sphi 0, %s131
    %s134 = sphi 0, %s133
    %s148 = sphi 0, %s134
    %s152 = sphi 0, %s152
    %s154 = sphi 0, %s152
    %s155 = sphi 0, %s154
    %s169 = sphi 0, %s155
    %s175 = sphi 0, %s177
    %s178 = sphi 0, %s175
    %s179 = sphi 0, %s178
    %s195 = sphi 0, %s179
  $region4: #{pareto_set_model_forward.1} parent=0 // loop_header_branch
    %16 = sbr.rel (%p14) target = $region8
  $region5: #{pareto_set_model_forward.1} parent=0 // loop_body
    %s18 = ssub.s32 %s13, 1
    %s19 = ssub.s32 %s13, 2
    %s20 = sadd.s32 %s13, 1
    %s21 = ssub.s32 %s13, %s20
    %p22 = scmp.eq.s32.totalorder %s21, 0
    %s24 = sadd.s32 %s23, 1
    %s25 = scalar_select %p22, %s23, %s24
    %p28 = pneg %p22
    %p29 = scmp.eq.s32.totalorder %s13, 1
    %p30 = por %p28, %p29
    %p31 = scmp.ne.s32.totalorder %s23, %s26
    %p32 = scmp.eq.s32.totalorder %s13, 0
    %p33 = por %p31, %p32
    %p34 = scmp.ne.s32.totalorder %s23, %s26
    %p35 = scmp.eq.s32.totalorder %s18, 1
    %p36 = por %p34, %p35
    %p37 = scmp.ne.s32.totalorder %s26, %s27
    %p38 = scmp.eq.s32.totalorder %s18, 0
    %p39 = por %p37, %p38
    %p40 = scmp.ne.s32.totalorder %s26, %s27
    %p41 = scmp.eq.s32.totalorder %s19, 1
    %p42 = por %p40, %p41
    %p44 = scmp.ne.s32.totalorder %s27, %s43
    %p45 = scmp.eq.s32.totalorder %s19, 0
    %p46 = por %p44, %p45
    %s48 = sadd.s32 %s47, 1
    %p51 = scmp.eq.s32.totalorder %s13, 1
    %p52 = scmp.ne.s32.totalorder %s47, %s49
    %p53 = scmp.eq.s32.totalorder %s13, 0
    %p54 = por %p52, %p53
    %p55 = scmp.ne.s32.totalorder %s47, %s49
    %p56 = scmp.eq.s32.totalorder %s18, 1
    %p57 = por %p55, %p56
    %p58 = scmp.ne.s32.totalorder %s49, %s50
    %p59 = scmp.eq.s32.totalorder %s18, 0
    %p60 = por %p58, %p59
    %p61 = scmp.ne.s32.totalorder %s49, %s50
    %p62 = scmp.eq.s32.totalorder %s19, 1
    %p63 = por %p61, %p62
    %p65 = scmp.ne.s32.totalorder %s50, %s64
    %p66 = scmp.eq.s32.totalorder %s19, 0
    %p67 = por %p65, %p66
    %s69 = sadd.s32 %s68, 1
    %p72 = scmp.eq.s32.totalorder %s13, 1
    %p73 = scmp.ne.s32.totalorder %s68, %s70
    %p74 = scmp.eq.s32.totalorder %s13, 0
    %p75 = por %p73, %p74
    %p76 = scmp.ne.s32.totalorder %s68, %s70
    %p77 = scmp.eq.s32.totalorder %s18, 1
    %p78 = por %p76, %p77
    %p79 = scmp.ne.s32.totalorder %s70, %s71
    %p80 = scmp.eq.s32.totalorder %s18, 0
    %p81 = por %p79, %p80
    %p82 = scmp.ne.s32.totalorder %s70, %s71
    %p83 = scmp.eq.s32.totalorder %s19, 1
    %p84 = por %p82, %p83
    %p86 = scmp.ne.s32.totalorder %s71, %s85
    %p87 = scmp.eq.s32.totalorder %s19, 0
    %p88 = por %p86, %p87
    %s90 = sadd.s32 %s89, 1
    %p93 = scmp.eq.s32.totalorder %s13, 1
    %p94 = scmp.ne.s32.totalorder %s89, %s91
    %p95 = scmp.eq.s32.totalorder %s13, 0
    %p96 = por %p94, %p95
    %p97 = scmp.ne.s32.totalorder %s89, %s91
    %p98 = scmp.eq.s32.totalorder %s18, 1
    %p99 = por %p97, %p98
    %p100 = scmp.ne.s32.totalorder %s91, %s92
    %p101 = scmp.eq.s32.totalorder %s18, 0
    %p102 = por %p100, %p101
    %p103 = scmp.ne.s32.totalorder %s91, %s92
    %p104 = scmp.eq.s32.totalorder %s19, 1
    %p105 = por %p103, %p104
    %p107 = scmp.ne.s32.totalorder %s92, %s106
    %p108 = scmp.eq.s32.totalorder %s19, 0
    %p109 = por %p107, %p108
    %s111 = sadd.s32 %s110, 1
    %p114 = scmp.eq.s32.totalorder %s13, 1
    %p115 = scmp.ne.s32.totalorder %s110, %s112
    %p116 = scmp.eq.s32.totalorder %s13, 0
    %p117 = por %p115, %p116
    %p118 = scmp.ne.s32.totalorder %s110, %s112
    %p119 = scmp.eq.s32.totalorder %s18, 1
    %p120 = por %p118, %p119
    %p121 = scmp.ne.s32.totalorder %s112, %s113
    %p122 = scmp.eq.s32.totalorder %s18, 0
    %p123 = por %p121, %p122
    %p124 = scmp.ne.s32.totalorder %s112, %s113
    %p125 = scmp.eq.s32.totalorder %s19, 1
    %p126 = por %p124, %p125
    %p128 = scmp.ne.s32.totalorder %s113, %s127
    %p129 = scmp.eq.s32.totalorder %s19, 0
    %p130 = por %p128, %p129
    %s132 = sadd.s32 %s131, 1
    %p135 = scmp.eq.s32.totalorder %s13, 1
    %p136 = scmp.ne.s32.totalorder %s131, %s133
    %p137 = scmp.eq.s32.totalorder %s13, 0
    %p138 = por %p136, %p137
    %p139 = scmp.ne.s32.totalorder %s131, %s133
    %p140 = scmp.eq.s32.totalorder %s18, 1
    %p141 = por %p139, %p140
    %p142 = scmp.ne.s32.totalorder %s133, %s134
    %p143 = scmp.eq.s32.totalorder %s18, 0
    %p144 = por %p142, %p143
    %p145 = scmp.ne.s32.totalorder %s133, %s134
    %p146 = scmp.eq.s32.totalorder %s19, 1
    %p147 = por %p145, %p146
    %p149 = scmp.ne.s32.totalorder %s134, %s148
    %p150 = scmp.eq.s32.totalorder %s19, 0
    %p151 = por %p149, %p150
    %s153 = sadd.s32 %s152, 1
    %p156 = scmp.eq.s32.totalorder %s13, 1
    %p157 = scmp.ne.s32.totalorder %s152, %s154
    %p158 = scmp.eq.s32.totalorder %s13, 0
    %p159 = por %p157, %p158
    %p160 = scmp.ne.s32.totalorder %s152, %s154
    %p161 = scmp.eq.s32.totalorder %s18, 1
    %p162 = por %p160, %p161
    %p163 = scmp.ne.s32.totalorder %s154, %s155
    %p164 = scmp.eq.s32.totalorder %s18, 0
    %p165 = por %p163, %p164
    %p166 = scmp.ne.s32.totalorder %s154, %s155
    %p167 = scmp.eq.s32.totalorder %s19, 1
    %p168 = por %p166, %p167
    %p170 = scmp.ne.s32.totalorder %s155, %s169
    %p171 = scmp.eq.s32.totalorder %s19, 0
    %p172 = por %p170, %p171
    %s173 = ssub.s32 %s13, %s20
    %p174 = scmp.eq.s32.totalorder %s173, 0
    %s176 = sadd.s32 %s175, 1
    %s177 = scalar_select %p174, %s175, %s176
    %p180 = pneg %p174
    %p181 = scmp.eq.s32.totalorder %s13, 1
    %p182 = por %p180, %p181
    %p183 = scmp.ne.s32.totalorder %s175, %s178
    %p184 = scmp.eq.s32.totalorder %s13, 0
    %p185 = por %p183, %p184
    %p186 = scmp.ne.s32.totalorder %s175, %s178
    %p187 = scmp.eq.s32.totalorder %s18, 1
    %p188 = por %p186, %p187
    %p189 = scmp.ne.s32.totalorder %s178, %s179
    %p190 = scmp.eq.s32.totalorder %s18, 0
    %p191 = por %p189, %p190
    %p192 = scmp.ne.s32.totalorder %s178, %s179
    %p193 = scmp.eq.s32.totalorder %s19, 1
    %p194 = por %p192, %p193
    %p196 = scmp.ne.s32.totalorder %s179, %s195
    %p197 = scmp.eq.s32.totalorder %s19, 0
    %p198 = por %p196, %p197
    %p199 = scmp.le.s32.totalorder 1, %s13
    %p200 = scmp.lt.s32.totalorder %s13, 3
    %p201 = pnand %p199, %p200
    %p202 = pneg %p201
    // Predicated region
    $region9: #{pareto_set_model_forward.1} parent=5 // pred_check
      _
    $region10: #{pareto_set_model_forward.1} parent=5 // pred_check_branch
      %204 = sbr.rel (%p201) target = $region12
    $region11: #{pareto_set_model_forward.1} parent=5 // pred_region
      %s205 = ssub.s32 %s13, 1
      // Predicated region
      $region13: #{pareto_set_model_forward.1} parent=11 // pred_check
        %p206 = pneg %p60
      $region14: #{pareto_set_model_forward.1} parent=11 // pred_check_branch
        %208 = sbr.rel (%p206) target = $region16
      $region15: #{pareto_set_model_forward.1} parent=11 // pred_region
        _
      $region16: #{pareto_set_model_forward.1} parent=11 // pred_fallthru
        _
      // Predicated region
      $region17: #{pareto_set_model_forward.1} parent=11 // pred_check
        %p209 = pneg %p81
      $region18: #{pareto_set_model_forward.1} parent=11 // pred_check_branch
        %211 = sbr.rel (%p209) target = $region20
      $region19: #{pareto_set_model_forward.1} parent=11 // pred_region
        _
      $region20: #{pareto_set_model_forward.1} parent=11 // pred_fallthru
        _
      // Predicated region
      $region21: #{pareto_set_model_forward.1} parent=11 // pred_check
        %p212 = pneg %p102
      $region22: #{pareto_set_model_forward.1} parent=11 // pred_check_branch
        %214 = sbr.rel (%p212) target = $region24
      $region23: #{pareto_set_model_forward.1} parent=11 // pred_region
        _
      $region24: #{pareto_set_model_forward.1} parent=11 // pred_fallthru
        _
      // Predicated region
      $region25: #{pareto_set_model_forward.1} parent=11 // pred_check
        %p215 = pneg %p123
      $region26: #{pareto_set_model_forward.1} parent=11 // pred_check_branch
        %217 = sbr.rel (%p215) target = $region28
      $region27: #{pareto_set_model_forward.1} parent=11 // pred_region
        _
      $region28: #{pareto_set_model_forward.1} parent=11 // pred_fallthru
        _
      // Predicated region
      $region29: #{pareto_set_model_forward.1} parent=11 // pred_check
        %p218 = pneg %p144
      $region30: #{pareto_set_model_forward.1} parent=11 // pred_check_branch
        %220 = sbr.rel (%p218) target = $region32
      $region31: #{pareto_set_model_forward.1} parent=11 // pred_region
        _
      $region32: #{pareto_set_model_forward.1} parent=11 // pred_fallthru
        _
      // Predicated region
      $region33: #{pareto_set_model_forward.1} parent=11 // pred_check
        %p221 = pneg %p165
      $region34: #{pareto_set_model_forward.1} parent=11 // pred_check_branch
        %223 = sbr.rel (%p221) target = $region36
      $region35: #{pareto_set_model_forward.1} parent=11 // pred_region
        _
      $region36: #{pareto_set_model_forward.1} parent=11 // pred_fallthru
        _
    $region12: #{pareto_set_model_forward.1} parent=5 // pred_fallthru
      _
    %p224 = scmp.lt.s32.totalorder %s13, 2
    // Predicated region
    $region37: #{pareto_set_model_forward.1} parent=5 // pred_check
      %p225 = pneg %p224
    $region38: #{pareto_set_model_forward.1} parent=5 // pred_check_branch
      %227 = sbr.rel (%p225) target = $region40
    $region39: #{pareto_set_model_forward.1} parent=5 // pred_region
      // Predicated region
      $region41: #{pareto_set_model_forward.1} parent=39 // pred_check
        %p228 = pneg %p33
      $region42: #{pareto_set_model_forward.1} parent=39 // pred_check_branch
        %230 = sbr.rel (%p228) target = $region44
      $region43: #{pareto_set_model_forward.1} parent=39 // pred_region
        %s231 = smul.u32 4, %s13
        %p232 = scmp.lt.s32.totalorder %s231, 7
        %s233 = scalar_select %p232, %s231, 7
        %s234 = smul.addr %s233, 8
        %s235 = scalar_lea.vmem %s0, %s234
        %s236 = smul.u32 4, %s13
      $region44: #{pareto_set_model_forward.1} parent=39 // pred_fallthru
        _
    $region40: #{pareto_set_model_forward.1} parent=5 // pred_fallthru
      _
    %p237 = scmp.le.s32.totalorder 1, %s13
    %p238 = scmp.lt.s32.totalorder %s13, 3
    %p239 = pnand %p237, %p238
    %p240 = pneg %p239
    // Predicated region
    $region45: #{pareto_set_model_forward.1} parent=5 // pred_check
      _
    $region46: #{pareto_set_model_forward.1} parent=5 // pred_check_branch
      %242 = sbr.rel (%p239) target = $region48
    $region47: #{pareto_set_model_forward.1} parent=5 // pred_region
      %s243 = ssub.s32 %s13, 1
      %s244 = smul.u32 4, %s18
      %p245 = scmp.lt.s32.totalorder %s244, 7
      %s246 = scalar_select %p245, %s244, 7
      %s247 = smul.addr %s246, 8
      %s248 = scalar_lea.vmem %s0, %s247
      %p249 = pneg %p39
      %p250 = pneg %p36
      %p251 = pneg %p60
      %p252 = pneg %p57
      %p253 = pneg %p81
      %p254 = pneg %p78
      %p255 = pneg %p102
      %p256 = pneg %p99
      %p257 = pneg %p123
      %p258 = pneg %p120
      %p259 = pneg %p144
      %p260 = pneg %p141
      %p261 = pneg %p165
      %p262 = pneg %p162
      %p263 = pneg %p191
      %p264 = pneg %p188
      %s265 = smul.u32 4, %s18
      %p266 = scmp.lt.s32.totalorder %s265, 7
      %s267 = scalar_select %p266, %s265, 7
      %s268 = smul.addr %s267, 8
      %s269 = scalar_lea.vmem %s7, %s268
      %s270 = smul.u32 4, %s18
      %p271 = scmp.lt.s32.totalorder %s270, 7
      %s272 = scalar_select %p271, %s270, 7
      %s273 = smul.addr %s272, 8
      %s274 = scalar_lea.vmem %s0, %s273
      %s275 = smul.u32 4, %s18
      %s276 = smul.u32 4, %s18
      %p277 = scmp.lt.s32.totalorder %s276, 7
      %s278 = scalar_select %p277, %s276, 7
      %s279 = smul.addr %s278, 8
      %s280 = scalar_lea.vmem %s7, %s279
      %s281 = smul.u32 4, %s18
      %v282 = vld [vmem:[%s274] sm:$0xff]
      %v283 = vld [vmem:[%s274 + $0x8] sm:$0xff]
      %v284 = vld [vmem:[%s274 + $0x10] sm:$0xff]
      %v285 = vld [vmem:[%s274 + $0x18] sm:$0xff]
      %v286 = vld [vmem:[%s1] sm:$0x77]
      %v287 = vld [vmem:[%s2] sm:$0x3]
      %289 = vset.pattern.permute.xlu0 0
      %290 = vperm.xlu0 %289, %v282
      %v291 = vpop.permute.xlu0 %290
      %294 = vset.pattern.permute.xlu0 0
      %295 = vperm.xlu0 %294, %v283
      %v296 = vpop.permute.xlu0 %295
      %299 = vset.pattern.permute.xlu0 0
      %300 = vperm.xlu0 %299, %v284
      %v301 = vpop.permute.xlu0 %300
      %304 = vset.pattern.permute.xlu0 0
      %305 = vperm.xlu0 %304, %v285
      %v306 = vpop.permute.xlu0 %305
      %v309 = vlaneseq
      %v310 = vshrl.u32 %v309, 7
      %v311 = vsub.s32 0, %v310
      %v312 = vrot.slane %v286, %v311
      %v313 = vlaneseq
      %v314 = vshrl.u32 %v313, 7
      %v315 = vsub.s32 4, %v314
      %v316 = vrot.slane %v286, %v315
      %v319 = vlaneseq
      %v320 = vshrl.u32 %v319, 7
      %v321 = vsub.s32 0, %v320
      %v322 = vrot.slane %v312, %v321
      %v323 = vlaneseq
      %v324 = vshrl.u32 %v323, 7
      %v325 = vsub.s32 0, %v324
      %v326 = vrot.slane %v316, %v325
      %v327 = vmul.f32 %v291, %v322
      %v328 = vmul.f32 %v291, %v326
      %v329 = vmul.f32 %v296, %v322
      %v330 = vmul.f32 %v296, %v326
      %v331 = vmul.f32 %v301, %v322
      %v332 = vmul.f32 %v301, %v326
      %v333 = vmul.f32 %v306, %v322
      %v334 = vmul.f32 %v306, %v326
      %v336 = vlaneseq
      %v337 = vshrl.u32 %v336, 7
      %v338 = vsub.s32 0, %v337
      %v339 = vrot.slane %v287, %v338
      %v340 = vlaneseq
      %v341 = vshrl.u32 %v340, 7
      %v342 = vsub.s32 1, %v341
      %v343 = vrot.slane %v287, %v342
      %v346 = vadd.f32 %v339, %v327
      %v347 = vadd.f32 %v343, %v328
      %v348 = vadd.f32 %v339, %v329
      %v349 = vadd.f32 %v343, %v330
      %v350 = vadd.f32 %v339, %v331
      %v351 = vadd.f32 %v343, %v332
      %v352 = vadd.f32 %v339, %v333
      %v353 = vadd.f32 %v343, %v334
      %354 = vset.pattern.permute.xlu0 1
      %355 = vperm.xlu0 %354, %v282
      %v356 = vpop.permute.xlu0 %355
      %358 = vset.pattern.permute.xlu0 1
      %359 = vperm.xlu0 %358, %v283
      %v360 = vpop.permute.xlu0 %359
      %362 = vset.pattern.permute.xlu0 1
      %363 = vperm.xlu0 %362, %v284
      %v364 = vpop.permute.xlu0 %363
      %366 = vset.pattern.permute.xlu0 1
      %367 = vperm.xlu0 %366, %v285
      %v368 = vpop.permute.xlu0 %367
      %v370 = vlaneseq
      %v371 = vshrl.u32 %v370, 7
      %v372 = vsub.s32 1, %v371
      %v373 = vrot.slane %v286, %v372
      %v374 = vlaneseq
      %v375 = vshrl.u32 %v374, 7
      %v376 = vsub.s32 5, %v375
      %v377 = vrot.slane %v286, %v376
      %v380 = vlaneseq
      %v381 = vshrl.u32 %v380, 7
      %v382 = vsub.s32 1, %v381
      %v383 = vrot.slane %v373, %v382
      %v384 = vlaneseq
      %v385 = vshrl.u32 %v384, 7
      %v386 = vsub.s32 1, %v385
      %v387 = vrot.slane %v377, %v386
      %v388 = vmul.f32 %v356, %v383
      %v389 = vmul.f32 %v356, %v387
      %v390 = vmul.f32 %v360, %v383
      %v391 = vmul.f32 %v360, %v387
      %v392 = vmul.f32 %v364, %v383
      %v393 = vmul.f32 %v364, %v387
      %v394 = vmul.f32 %v368, %v383
      %v395 = vmul.f32 %v368, %v387
      %v396 = vadd.f32 %v346, %v388
      %v397 = vadd.f32 %v347, %v389
      %v398 = vadd.f32 %v348, %v390
      %v399 = vadd.f32 %v349, %v391
      %v400 = vadd.f32 %v350, %v392
      %v401 = vadd.f32 %v351, %v393
      %v402 = vadd.f32 %v352, %v394
      %v403 = vadd.f32 %v353, %v395
      %404 = vset.pattern.permute.xlu0 2
      %405 = vperm.xlu0 %404, %v282
      %v406 = vpop.permute.xlu0 %405
      %408 = vset.pattern.permute.xlu0 2
      %409 = vperm.xlu0 %408, %v283
      %v410 = vpop.permute.xlu0 %409
      %412 = vset.pattern.permute.xlu0 2
      %413 = vperm.xlu0 %412, %v284
      %v414 = vpop.permute.xlu0 %413
      %416 = vset.pattern.permute.xlu0 2
      %417 = vperm.xlu0 %416, %v285
      %v418 = vpop.permute.xlu0 %417
      %v420 = vlaneseq
      %v421 = vshrl.u32 %v420, 7
      %v422 = vsub.s32 2, %v421
      %v423 = vrot.slane %v286, %v422
      %v424 = vlaneseq
      %v425 = vshrl.u32 %v424, 7
      %v426 = vsub.s32 6, %v425
      %v427 = vrot.slane %v286, %v426
      %v430 = vlaneseq
      %v431 = vshrl.u32 %v430, 7
      %v432 = vsub.s32 2, %v431
      %v433 = vrot.slane %v423, %v432
      %v434 = vlaneseq
      %v435 = vshrl.u32 %v434, 7
      %v436 = vsub.s32 2, %v435
      %v437 = vrot.slane %v427, %v436
      %v438 = vmul.f32 %v406, %v433
      %v439 = vmul.f32 %v406, %v437
      %v440 = vmul.f32 %v410, %v433
      %v441 = vmul.f32 %v410, %v437
      %v442 = vmul.f32 %v414, %v433
      %v443 = vmul.f32 %v414, %v437
      %v444 = vmul.f32 %v418, %v433
      %v445 = vmul.f32 %v418, %v437
      %v446 = vadd.f32 %v396, %v438
      %v447 = vadd.f32 %v397, %v439
      %v448 = vadd.f32 %v398, %v440
      %v449 = vadd.f32 %v399, %v441
      %v450 = vadd.f32 %v400, %v442
      %v451 = vadd.f32 %v401, %v443
      %v452 = vadd.f32 %v402, %v444
      %v453 = vadd.f32 %v403, %v445
      %v454 = vmax.f32 %v446, 0.0
      %v455 = vmax.f32 %v447, 0.0
      %v456 = vmax.f32 %v448, 0.0
      %v457 = vmax.f32 %v449, 0.0
      %v458 = vmax.f32 %v450, 0.0
      %v459 = vmax.f32 %v451, 0.0
      %v460 = vmax.f32 %v452, 0.0
      %v461 = vmax.f32 %v453, 0.0
      %v462 = vld [vmem:[%s3] sm:$0xff]
      %v463 = vld [vmem:[%s3 + $0x8] sm:$0xff]
      %v464 = vld [vmem:[%s3 + $0x10] sm:$0xff]
      %v465 = vld [vmem:[%s3 + $0x18] sm:$0xff]
      %v466 = vld [vmem:[%s3 + $0x20] sm:$0xff]
      %v467 = vld [vmem:[%s3 + $0x28] sm:$0xff]
      %v468 = vld [vmem:[%s3 + $0x30] sm:$0xff]
      %v469 = vld [vmem:[%s3 + $0x38] sm:$0xff]
      %v470 = vld [vmem:[%s3 + $0x40] sm:$0xff]
      %v471 = vld [vmem:[%s3 + $0x48] sm:$0xff]
      %v472 = vld [vmem:[%s3 + $0x50] sm:$0xff]
      %v473 = vld [vmem:[%s3 + $0x58] sm:$0xff]
      %v474 = vld [vmem:[%s3 + $0x60] sm:$0xff]
      %v475 = vld [vmem:[%s3 + $0x68] sm:$0xff]
      %v476 = vld [vmem:[%s3 + $0x70] sm:$0xff]
      %v477 = vld [vmem:[%s3 + $0x78] sm:$0xff]
      %v478 = vld [vmem:[%s3 + $0x80] sm:$0xff]
      %v479 = vld [vmem:[%s3 + $0x88] sm:$0xff]
      %v480 = vld [vmem:[%s3 + $0x90] sm:$0xff]
      %v481 = vld [vmem:[%s3 + $0x98] sm:$0xff]
      %v482 = vld [vmem:[%s3 + $0xa0] sm:$0xff]
      %v483 = vld [vmem:[%s3 + $0xa8] sm:$0xff]
      %v484 = vld [vmem:[%s3 + $0xb0] sm:$0xff]
      %v485 = vld [vmem:[%s3 + $0xb8] sm:$0xff]
      %v486 = vld [vmem:[%s3 + $0xc0] sm:$0xff]
      %v487 = vld [vmem:[%s3 + $0xc8] sm:$0xff]
      %v488 = vld [vmem:[%s3 + $0xd0] sm:$0xff]
      %v489 = vld [vmem:[%s3 + $0xd8] sm:$0xff]
      %v490 = vld [vmem:[%s3 + $0xe0] sm:$0xff]
      %v491 = vld [vmem:[%s3 + $0xe8] sm:$0xff]
      %v492 = vld [vmem:[%s3 + $0xf0] sm:$0xff]
      %v493 = vld [vmem:[%s3 + $0xf8] sm:$0xff]
      %v494 = vld [vmem:[%s3 + $0x100] sm:$0xff]
      %v495 = vld [vmem:[%s3 + $0x108] sm:$0xff]
      %v496 = vld [vmem:[%s3 + $0x110] sm:$0xff]
      %v497 = vld [vmem:[%s3 + $0x118] sm:$0xff]
      %v498 = vld [vmem:[%s3 + $0x120] sm:$0xff]
      %v499 = vld [vmem:[%s3 + $0x128] sm:$0xff]
      %v500 = vld [vmem:[%s3 + $0x130] sm:$0xff]
      %v501 = vld [vmem:[%s3 + $0x138] sm:$0xff]
      %v502 = vld [vmem:[%s3 + $0x140] sm:$0xff]
      %v503 = vld [vmem:[%s3 + $0x148] sm:$0xff]
      %v504 = vld [vmem:[%s3 + $0x150] sm:$0xff]
      %v505 = vld [vmem:[%s3 + $0x158] sm:$0xff]
      %v506 = vld [vmem:[%s3 + $0x160] sm:$0xff]
      %v507 = vld [vmem:[%s3 + $0x168] sm:$0xff]
      %v508 = vld [vmem:[%s3 + $0x170] sm:$0xff]
      %v509 = vld [vmem:[%s3 + $0x178] sm:$0xff]
      %v510 = vld [vmem:[%s3 + $0x180] sm:$0xff]
      %v511 = vld [vmem:[%s3 + $0x188] sm:$0xff]
      %v512 = vld [vmem:[%s3 + $0x190] sm:$0xff]
      %v513 = vld [vmem:[%s3 + $0x198] sm:$0xff]
      %v514 = vld [vmem:[%s3 + $0x1a0] sm:$0xff]
      %v515 = vld [vmem:[%s3 + $0x1a8] sm:$0xff]
      %v516 = vld [vmem:[%s3 + $0x1b0] sm:$0xff]
      %v517 = vld [vmem:[%s3 + $0x1b8] sm:$0xff]
      %v518 = vld [vmem:[%s3 + $0x1c0] sm:$0xff]
      %v519 = vld [vmem:[%s3 + $0x1c8] sm:$0xff]
      %v520 = vld [vmem:[%s3 + $0x1d0] sm:$0xff]
      %v521 = vld [vmem:[%s3 + $0x1d8] sm:$0xff]
      %v522 = vld [vmem:[%s3 + $0x1e0] sm:$0xff]
      %v523 = vld [vmem:[%s3 + $0x1e8] sm:$0xff]
      %v524 = vld [vmem:[%s3 + $0x1f0] sm:$0xff]
      %v525 = vld [vmem:[%s3 + $0x1f8] sm:$0xff]
      %v526 = vld [vmem:[%s4] sm:$0x3]
      %v528 = vlaneseq
      %v529 = vshrl.u32 %v528, 7
      %v530 = vsub.s32 0, %v529
      %v531 = vrot.slane %v526, %v530
      %v532 = vlaneseq
      %v533 = vshrl.u32 %v532, 7
      %v534 = vsub.s32 1, %v533
      %v535 = vrot.slane %v526, %v534
      %538 = vmatprep.subr.mxu0 %v463
      %539 = vmatpush1.msra.mxu0 %v462
      %540 = vmatprep.subr.mxu0 %v465
      %541 = vmatpush1.msra.mxu0 %v464
      %542 = vmatprep.subr.mxu0 %v467
      %543 = vmatpush1.msra.mxu0 %v466
      %544 = vmatprep.subr.mxu0 %v469
      %545 = vmatpush1.msra.mxu0 %v468
      %546 = vmatprep.subr.mxu0 %v471
      %547 = vmatpush1.msra.mxu0 %v470
      %548 = vmatprep.subr.mxu0 %v473
      %549 = vmatpush1.msra.mxu0 %v472
      %550 = vmatprep.subr.mxu0 %v475
      %551 = vmatpush1.msra.mxu0 %v474
      %552 = vmatprep.subr.mxu0 %v477
      %553 = vmatpush1.msra.mxu0 %v476
      %554 = vmatprep.subr.mxu0 %v479
      %555 = vmatpush1.msra.mxu0 %v478
      %556 = vmatprep.subr.mxu0 %v481
      %557 = vmatpush1.msra.mxu0 %v480
      %558 = vmatprep.subr.mxu0 %v483
      %559 = vmatpush1.msra.mxu0 %v482
      %560 = vmatprep.subr.mxu0 %v485
      %561 = vmatpush1.msra.mxu0 %v484
      %562 = vmatprep.subr.mxu0 %v487
      %563 = vmatpush1.msra.mxu0 %v486
      %564 = vmatprep.subr.mxu0 %v489
      %565 = vmatpush1.msra.mxu0 %v488
      %566 = vmatprep.subr.mxu0 %v491
      %567 = vmatpush1.msra.mxu0 %v490
      %568 = vmatprep.subr.mxu0 %v493
      %569 = vmatpush1.msra.mxu0 %v492
      %570 = vmatprep.subr.mxu0 %v495
      %571 = vmatpush1.msra.mxu0 %v494
      %572 = vmatprep.subr.mxu0 %v497
      %573 = vmatpush1.msra.mxu0 %v496
      %574 = vmatprep.subr.mxu0 %v499
      %575 = vmatpush1.msra.mxu0 %v498
      %576 = vmatprep.subr.mxu0 %v501
      %577 = vmatpush1.msra.mxu0 %v500
      %578 = vmatprep.subr.mxu0 %v503
      %579 = vmatpush1.msra.mxu0 %v502
      %580 = vmatprep.subr.mxu0 %v505
      %581 = vmatpush1.msra.mxu0 %v504
      %582 = vmatprep.subr.mxu0 %v507
      %583 = vmatpush1.msra.mxu0 %v506
      %584 = vmatprep.subr.mxu0 %v509
      %585 = vmatpush1.msra.mxu0 %v508
      %586 = vmatprep.subr.mxu0 %v511
      %587 = vmatpush1.msra.mxu0 %v510
      %588 = vmatprep.subr.mxu0 %v513
      %589 = vmatpush1.msra.mxu0 %v512
      %590 = vmatprep.subr.mxu0 %v515
      %591 = vmatpush1.msra.mxu0 %v514
      %592 = vmatprep.subr.mxu0 %v517
      %593 = vmatpush1.msra.mxu0 %v516
      %594 = vmatprep.subr.mxu0 %v519
      %595 = vmatpush1.msra.mxu0 %v518
      %596 = vmatprep.subr.mxu0 %v521
      %597 = vmatpush1.msra.mxu0 %v520
      %598 = vmatprep.subr.mxu0 %v523
      %599 = vmatpush1.msra.mxu0 %v522
      %600 = vmatprep.subr.mxu0 %v525
      %601 = vmatpush1.msra.mxu0 %v524
      %602 = vmatprep.mubr.f32.mxu0 %v455
      %603 = vmatmul.mubr.f32.gmra.mrb[0].mxu0 %v454
      %v604 = vpop.f32.mrb[0].mxu0
      %v605 = vadd.f32 %v531, %v604
      %v606 = vpop.f32.mrb[0].mxu0
      %v607 = vadd.f32 %v535, %v606
      %608 = vmatprep.mubr.f32.mxu0 %v457
      %609 = vmatmul.mubr.f32.gmra.mrb[0].mxu0 %v456
      %v610 = vpop.f32.mrb[0].mxu0
      %v611 = vadd.f32 %v531, %v610
      %v612 = vpop.f32.mrb[0].mxu0
      %v613 = vadd.f32 %v535, %v612
      %614 = vmatprep.mubr.f32.mxu0 %v459
      %615 = vmatmul.mubr.f32.gmra.mrb[0].mxu0 %v458
      %v616 = vpop.f32.mrb[0].mxu0
      %v617 = vadd.f32 %v531, %v616
      %v618 = vpop.f32.mrb[0].mxu0
      %v619 = vadd.f32 %v535, %v618
      %620 = vmatprep.mubr.f32.mxu0 %v461
      %621 = vmatmul.mubr.f32.gmra.mrb[0].mxu0 %v460
      %v622 = vpop.f32.mrb[0].mxu0
      %v623 = vadd.f32 %v531, %v622
      %v624 = vpop.f32.mrb[0].mxu0
      %v625 = vadd.f32 %v535, %v624
      %626 = vdwg.mxu0
      %v627 = vmax.f32 %v605, 0.0
      %v628 = vmax.f32 %v607, 0.0
      %v629 = vmax.f32 %v611, 0.0
      %v630 = vmax.f32 %v613, 0.0
      %v631 = vmax.f32 %v617, 0.0
      %v632 = vmax.f32 %v619, 0.0
      %v633 = vmax.f32 %v623, 0.0
      %v634 = vmax.f32 %v625, 0.0
      %v635 = vld [vmem:[%s5] sm:$0xff]
      %v636 = vld [vmem:[%s5 + $0x8] sm:$0xff]
      %v637 = vld [vmem:[%s5 + $0x10] sm:$0xff]
      %v638 = vld [vmem:[%s5 + $0x18] sm:$0xff]
      %v639 = vld [vmem:[%s5 + $0x20] sm:$0xff]
      %v640 = vld [vmem:[%s5 + $0x28] sm:$0xff]
      %v641 = vld [vmem:[%s5 + $0x30] sm:$0xff]
      %v642 = vld [vmem:[%s5 + $0x38] sm:$0xff]
      %v643 = vld [vmem:[%s5 + $0x40] sm:$0xff]
      %v644 = vld [vmem:[%s5 + $0x48] sm:$0xff]
      %v645 = vld [vmem:[%s5 + $0x50] sm:$0xff]
      %v646 = vld [vmem:[%s5 + $0x58] sm:$0xff]
      %v647 = vld [vmem:[%s5 + $0x60] sm:$0xff]
      %v648 = vld [vmem:[%s5 + $0x68] sm:$0xff]
      %v649 = vld [vmem:[%s5 + $0x70] sm:$0xff]
      %v650 = vld [vmem:[%s5 + $0x78] sm:$0xff]
      %v651 = vld [vmem:[%s5 + $0x80] sm:$0xff]
      %v652 = vld [vmem:[%s5 + $0x88] sm:$0xff]
      %v653 = vld [vmem:[%s5 + $0x90] sm:$0xff]
      %v654 = vld [vmem:[%s5 + $0x98] sm:$0xff]
      %v655 = vld [vmem:[%s5 + $0xa0] sm:$0xff]
      %v656 = vld [vmem:[%s5 + $0xa8] sm:$0xff]
      %v657 = vld [vmem:[%s5 + $0xb0] sm:$0xff]
      %v658 = vld [vmem:[%s5 + $0xb8] sm:$0xff]
      %v659 = vld [vmem:[%s5 + $0xc0] sm:$0xff]
      %v660 = vld [vmem:[%s5 + $0xc8] sm:$0xff]
      %v661 = vld [vmem:[%s5 + $0xd0] sm:$0xff]
      %v662 = vld [vmem:[%s5 + $0xd8] sm:$0xff]
      %v663 = vld [vmem:[%s5 + $0xe0] sm:$0xff]
      %v664 = vld [vmem:[%s5 + $0xe8] sm:$0xff]
      %v665 = vld [vmem:[%s5 + $0xf0] sm:$0xff]
      %v666 = vld [vmem:[%s5 + $0xf8] sm:$0xff]
      %v667 = vld [vmem:[%s6] sm:$0x1]
      %v669 = vlaneseq
      %v670 = vshrl.u32 %v669, 7
      %v671 = vsub.s32 0, %v670
      %v672 = vrot.slane %v667, %v671
      %674 = vmatprep.subr.mxu0 0.0
      %675 = vmatpush1.msra.mxu0 %v635
      %676 = vmatprep.subr.mxu0 0.0
      %677 = vmatpush1.msra.mxu0 %v636
      %678 = vmatprep.subr.mxu0 0.0
      %679 = vmatpush1.msra.mxu0 %v637
      %680 = vmatprep.subr.mxu0 0.0
      %681 = vmatpush1.msra.mxu0 %v638
      %682 = vmatprep.subr.mxu0 0.0
      %683 = vmatpush1.msra.mxu0 %v639
      %684 = vmatprep.subr.mxu0 0.0
      %685 = vmatpush1.msra.mxu0 %v640
      %686 = vmatprep.subr.mxu0 0.0
      %687 = vmatpush1.msra.mxu0 %v641
      %688 = vmatprep.subr.mxu0 0.0
      %689 = vmatpush1.msra.mxu0 %v642
      %690 = vmatprep.subr.mxu0 0.0
      %691 = vmatpush1.msra.mxu0 %v643
      %692 = vmatprep.subr.mxu0 0.0
      %693 = vmatpush1.msra.mxu0 %v644
      %694 = vmatprep.subr.mxu0 0.0
      %695 = vmatpush1.msra.mxu0 %v645
      %696 = vmatprep.subr.mxu0 0.0
      %697 = vmatpush1.msra.mxu0 %v646
      %698 = vmatprep.subr.mxu0 0.0
      %699 = vmatpush1.msra.mxu0 %v647
      %700 = vmatprep.subr.mxu0 0.0
      %701 = vmatpush1.msra.mxu0 %v648
      %702 = vmatprep.subr.mxu0 0.0
      %703 = vmatpush1.msra.mxu0 %v649
      %704 = vmatprep.subr.mxu0 0.0
      %705 = vmatpush1.msra.mxu0 %v650
      %706 = vmatprep.subr.mxu0 0.0
      %707 = vmatpush1.msra.mxu0 %v651
      %708 = vmatprep.subr.mxu0 0.0
      %709 = vmatpush1.msra.mxu0 %v652
      %710 = vmatprep.subr.mxu0 0.0
      %711 = vmatpush1.msra.mxu0 %v653
      %712 = vmatprep.subr.mxu0 0.0
      %713 = vmatpush1.msra.mxu0 %v654
      %714 = vmatprep.subr.mxu0 0.0
      %715 = vmatpush1.msra.mxu0 %v655
      %716 = vmatprep.subr.mxu0 0.0
      %717 = vmatpush1.msra.mxu0 %v656
      %718 = vmatprep.subr.mxu0 0.0
      %719 = vmatpush1.msra.mxu0 %v657
      %720 = vmatprep.subr.mxu0 0.0
      %721 = vmatpush1.msra.mxu0 %v658
      %722 = vmatprep.subr.mxu0 0.0
      %723 = vmatpush1.msra.mxu0 %v659
      %724 = vmatprep.subr.mxu0 0.0
      %725 = vmatpush1.msra.mxu0 %v660
      %726 = vmatprep.subr.mxu0 0.0
      %727 = vmatpush1.msra.mxu0 %v661
      %728 = vmatprep.subr.mxu0 0.0
      %729 = vmatpush1.msra.mxu0 %v662
      %730 = vmatprep.subr.mxu0 0.0
      %731 = vmatpush1.msra.mxu0 %v663
      %732 = vmatprep.subr.mxu0 0.0
      %733 = vmatpush1.msra.mxu0 %v664
      %734 = vmatprep.subr.mxu0 0.0
      %735 = vmatpush1.msra.mxu0 %v665
      %736 = vmatprep.subr.mxu0 0.0
      %737 = vmatpush1.msra.mxu0 %v666
      %738 = vmatprep.mubr.f32.mxu0 %v628
      %739 = vmatmul.mubr.f32.gmra.mrb[0].mxu0 %v627
      %v740 = vpop.f32.mrb[0].mxu0
      %v741 = vadd.f32 %v672, %v740
      %v742 = vpop.f32.mrb[0].mxu0
      %743 = vmatprep.mubr.f32.mxu0 %v630
      %744 = vmatmul.mubr.f32.gmra.mrb[0].mxu0 %v629
      %v745 = vpop.f32.mrb[0].mxu0
      %v746 = vadd.f32 %v672, %v745
      %v747 = vpop.f32.mrb[0].mxu0
      %748 = vmatprep.mubr.f32.mxu0 %v632
      %749 = vmatmul.mubr.f32.gmra.mrb[0].mxu0 %v631
      %v750 = vpop.f32.mrb[0].mxu0
      %v751 = vadd.f32 %v672, %v750
      %v752 = vpop.f32.mrb[0].mxu0
      %753 = vmatprep.mubr.f32.mxu0 %v634
      %754 = vmatmul.mubr.f32.gmra.mrb[0].mxu0 %v633
      %v755 = vpop.f32.mrb[0].mxu0
      %v756 = vadd.f32 %v672, %v755
      %v757 = vpop.f32.mrb[0].mxu0
      %758 = vdwg.mxu0
      %v759 = vxor.u32 %v741, 2147483648
      %v760 = vxor.u32 %v746, 2147483648
      %v761 = vxor.u32 %v751, 2147483648
      %v762 = vxor.u32 %v756, 2147483648
      %v763 = vmul.f32 %v759, 1.442695
      %v764 = vpow.pop %v763
      %v765 = vmul.f32 %v760, 1.442695
      %v766 = vpow.pop %v765
      %v767 = vmul.f32 %v761, 1.442695
      %v768 = vpow.pop %v767
      %v769 = vmul.f32 %v762, 1.442695
      %v770 = vpow.pop %v769
      %v771 = vadd.f32 %v764, 1.0
      %v772 = vadd.f32 %v766, 1.0
      %v773 = vadd.f32 %v768, 1.0
      %v774 = vadd.f32 %v770, 1.0
      %v775 = vrcp.pop %v771
      %v776 = vmul.f32 1.0, %v775
      %v777 = vrcp.pop %v772
      %v778 = vmul.f32 1.0, %v777
      %v779 = vrcp.pop %v773
      %v780 = vmul.f32 1.0, %v779
      %v781 = vrcp.pop %v774
      %v782 = vmul.f32 1.0, %v781
      %783 = vst [vmem:[%s280] sm:$0xff] %v776
      %784 = vst [vmem:[%s280 + $0x8] sm:$0xff] %v778
      %785 = vst [vmem:[%s280 + $0x10] sm:$0xff] %v780
      %786 = vst [vmem:[%s280 + $0x18] sm:$0xff] %v782
      %s787 = smul.u32 4, %s18
      %p788 = scmp.lt.s32.totalorder %s787, 7
      %s789 = scalar_select %p788, %s787, 7
      %s790 = smul.addr %s789, 8
      %s791 = scalar_lea.vmem %s7, %s790
      // Predicated region
      $region49: #{pareto_set_model_forward.1} parent=47 // pred_check
        %p792 = pneg %p188
      $region50: #{pareto_set_model_forward.1} parent=47 // pred_check_branch
        %794 = sbr.rel (%p792) target = $region52
      $region51: #{pareto_set_model_forward.1} parent=47 // pred_region
        %s795 = smul.u32 4, %s18
      $region52: #{pareto_set_model_forward.1} parent=47 // pred_fallthru
        _
    $region48: #{pareto_set_model_forward.1} parent=5 // pred_fallthru
      _
    %p796 = scmp.le.s32.totalorder 2, %s13
    // Predicated region
    $region53: #{pareto_set_model_forward.1} parent=5 // pred_check
      %p797 = pneg %p796
    $region54: #{pareto_set_model_forward.1} parent=5 // pred_check_branch
      %799 = sbr.rel (%p797) target = $region56
    $region55: #{pareto_set_model_forward.1} parent=5 // pred_region
      %s800 = ssub.s32 %s13, 2
      // Predicated region
      $region57: #{pareto_set_model_forward.1} parent=55 // pred_check
        %p801 = pneg %p194
      $region58: #{pareto_set_model_forward.1} parent=55 // pred_check_branch
        %803 = sbr.rel (%p801) target = $region60
      $region59: #{pareto_set_model_forward.1} parent=55 // pred_region
        %s804 = smul.u32 4, %s19
        %p805 = scmp.lt.s32.totalorder %s804, 7
        %s806 = scalar_select %p805, %s804, 7
        %s807 = smul.addr %s806, 8
        %s808 = scalar_lea.vmem %s7, %s807
      $region60: #{pareto_set_model_forward.1} parent=55 // pred_fallthru
        _
    $region56: #{pareto_set_model_forward.1} parent=5 // pred_fallthru
      _
  $region6: #{pareto_set_model_forward.1} parent=0 // loop_footer
    %s17 = sadd.s32 1, %s13
  $region7: #{pareto_set_model_forward.1} parent=0 // loop_footer_branch
    %12 = sbr.rel target = $region3
  $region8: #{pareto_set_model_forward.1} parent=0 // loop_exit
    _

</llo_original>
